<compile_context>
chip_gen: v5e
topology: v5e:2x2
jax: 0.10.0
libtpu: 0.0.40
codegen_flags: <defaults>
</compile_context>

<pallas_src>
import jax
import jax.numpy as jnp
from jax.experimental import pallas as pl
from jax.experimental.pallas import tpu as pltpu

EPS = 1e-5


# ----------------------------------------------------------------------------
# Shared helpers
# ----------------------------------------------------------------------------
def _fold_bn(s, q, gamma, beta, inv_m):
    """Fold raw sum / sum-of-squares into a per-channel scale & shift."""
    mu = s * inv_m
    var = q * inv_m - mu * mu
    sc = gamma * jax.lax.rsqrt(var + EPS)
    return sc, beta - mu * sc


def _tpu_vmem_capacity():
    try:
        return int(pltpu.get_tpu_info().vmem_capacity_bytes)
    except Exception:
        return 64 << 20        # conservative fallback: v7x physical VMEM / TC


# ----------------------------------------------------------------------------
# Fast path: everything VMEM-resident, single grid step, x/y fetched once.
# ----------------------------------------------------------------------------
def _make_resident_kernel(N, M):
    inv_m = 1.0 / float(M)

    def kernel(x_ref, y_ref, w1_ref, w2_ref,
               g1_ref, be1_ref, g2_ref, be2_ref, g3_ref, be3_ref, o_ref):
        C = w1_ref.shape[0]
        w1 = w1_ref[...]
        w2 = w2_ref[...]

        # ---- pass 1: global BN1/BN2 statistics of the conv outputs ---------
        s1 = jnp.zeros((C, 1), jnp.float32)
        q1 = jnp.zeros((C, 1), jnp.float32)
        s2 = jnp.zeros((C, 1), jnp.float32)
        q2 = jnp.zeros((C, 1), jnp.float32)
        for n in range(N):
            a1 = jnp.dot(w1, x_ref[n].astype(jnp.float32),
                         preferred_element_type=jnp.float32)
            a2 = jnp.dot(w2, y_ref[n].astype(jnp.float32),
                         preferred_element_type=jnp.float32)
            s1 += jnp.sum(a1, axis=1, keepdims=True)
            q1 += jnp.sum(a1 * a1, axis=1, keepdims=True)
            s2 += jnp.sum(a2, axis=1, keepdims=True)
            q2 += jnp.sum(a2 * a2, axis=1, keepdims=True)
        sc1, sh1 = _fold_bn(s1, q1, g1_ref[...], be1_ref[...], inv_m)
        sc2, sh2 = _fold_bn(s2, q2, g2_ref[...], be2_ref[...], inv_m)

        # ---- pass 2: gate + blend; stash blend in the output buffer --------
        sr = jnp.zeros((C, 1), jnp.float32)
        qr = jnp.zeros((C, 1), jnp.float32)
        for n in range(N):
            x = x_ref[n].astype(jnp.float32)
            y = y_ref[n].astype(jnp.float32)
            a1 = jnp.dot(w1, x, preferred_element_type=jnp.float32)
            a2 = jnp.dot(w2, y, preferred_element_type=jnp.float32)
            z1 = jnp.maximum(a1 * sc1 + sh1, 0.0)
            z2 = jnp.maximum(a2 * sc2 + sh2, 0.0)
            z = 0.5 * (jnp.tanh(0.5 * (z1 + z2)) + 1.0)   # sigmoid via 1 EUP op
            res = y + z * (x - y)                         # == x*z + y*(1-z)
            sr += jnp.sum(res, axis=1, keepdims=True)
            qr += jnp.sum(res * res, axis=1, keepdims=True)
            o_ref[n] = res.astype(o_ref.dtype)            # reuse out buf as scratch
        scr, shr = _fold_bn(sr, qr, g3_ref[...], be3_ref[...], inv_m)

        # ---- pass 3: BN3 applied in place on the stashed blend -------------
        for n in range(N):
            o_ref[n] = (o_ref[n].astype(jnp.float32) * scr + shr).astype(o_ref.dtype)

    return kernel


# ----------------------------------------------------------------------------
# Streaming path: 3 phases over tiled (Nb, C, tile) blocks, BN stats in scratch.
# ----------------------------------------------------------------------------
def _make_stream_kernel(M, Nb):
    inv_m = 1.0 / float(M)

    def kernel(x_ref, y_ref, w1_ref, w2_ref,
               g1_ref, be1_ref, g2_ref, be2_ref, g3_ref, be3_ref,
               o_ref,
               s1, q1, s2, q2, sr, qr):
        phase = pl.program_id(0)
        nb = pl.program_id(1)
        t = pl.program_id(2)
        first = jnp.logical_and(nb == 0, t == 0)

        w1 = w1_ref[...]
        w2 = w2_ref[...]

        # ---- init accumulators once, at the very first grid step -----------
        @pl.when(jnp.logical_and(phase == 0, first))
        def _init():
            for r in (s1, q1, s2, q2, sr, qr):
                r[...] = jnp.zeros_like(r)

        # ---- hoisted BN folds: done once per apply-phase, stored in scratch
        @pl.when(jnp.logical_and(phase == 1, first))
        def _fold_conv_bns():
            sc, sh = _fold_bn(s1[...], q1[...], g1_ref[...], be1_ref[...], inv_m)
            s1[...] = sc
            q1[...] = sh
            sc, sh = _fold_bn(s2[...], q2[...], g2_ref[...], be2_ref[...], inv_m)
            s2[...] = sc
            q2[...] = sh

        @pl.when(jnp.logical_and(phase == 2, first))
        def _fold_out_bn():
            sc, sh = _fold_bn(sr[...], qr[...], g3_ref[...], be3_ref[...], inv_m)
            sr[...] = sc
            qr[...] = sh

        # ---- phase 0: global BN1/BN2 statistics -----------------------------
        @pl.when(phase == 0)
        def _conv_stats():
            for n in range(Nb):
                a1 = jnp.dot(w1, x_ref[n].astype(jnp.float32),
                             preferred_element_type=jnp.float32)
                a2 = jnp.dot(w2, y_ref[n].astype(jnp.float32),
                             preferred_element_type=jnp.float32)
                s1[...] += jnp.sum(a1, axis=1, keepdims=True)
                q1[...] += jnp.sum(a1 * a1, axis=1, keepdims=True)
                s2[...] += jnp.sum(a2, axis=1, keepdims=True)
                q2[...] += jnp.sum(a2 * a2, axis=1, keepdims=True)

        # ---- phases 1 & 2: apply folded BN1/BN2, gate, blend ----------------
        @pl.when(phase >= 1)
        def _apply():
            sc1 = s1[...]
            sh1 = q1[...]
            sc2 = s2[...]
            sh2 = q2[...]
            for n in range(Nb):
                x = x_ref[n].astype(jnp.float32)
                y = y_ref[n].astype(jnp.float32)
                a1 = jnp.dot(w1, x, preferred_element_type=jnp.float32)
                a2 = jnp.dot(w2, y, preferred_element_type=jnp.float32)
                z1 = jnp.maximum(a1 * sc1 + sh1, 0.0)
                z2 = jnp.maximum(a2 * sc2 + sh2, 0.0)
                z = 0.5 * (jnp.tanh(0.5 * (z1 + z2)) + 1.0)   # sigmoid, 1 EUP op
                res = y + z * (x - y)

                @pl.when(phase == 1)
                def _res_stats(res=res):
                    sr[...] += jnp.sum(res, axis=1, keepdims=True)
                    qr[...] += jnp.sum(res * res, axis=1, keepdims=True)

                @pl.when(phase == 2)
                def _write(res=res, n=n):
                    o_ref[n] = (res * sr[...] + qr[...]).astype(o_ref.dtype)

    return kernel


# ----------------------------------------------------------------------------
# Tiling helpers
# ----------------------------------------------------------------------------
def _pick_tile(hwp, c, block_cap_bytes):
    """Largest lane-dense tile (multiple of 128, divides hwp) within the cap."""
    cap_lanes = max(128, block_cap_bytes // (4 * c))
    t = min(hwp, cap_lanes)
    t -= t % 128
    t = max(t, 128)
    while hwp % t != 0:
        t -= 128
    return t


def _pick_nb(n, c, tile, block_cap_bytes):
    """Largest divisor of n keeping the (Nb, C, tile) block under the cap."""
    best = 1
    for nb in range(1, n + 1):
        if n % nb == 0 and nb * c * tile * 4 <= block_cap_bytes:
            best = nb
    return best


# ----------------------------------------------------------------------------
# Wrapper
# ----------------------------------------------------------------------------
def gated_forward(x_nchw, y_nchw, params, *, force_stream=False):
    """x, y: (N, C, H, W) float32 -> (N, C, H, W).  Training-mode BN."""
    N, C, H, W = x_nchw.shape
    HW = H * W
    M = N * HW                                   # true BN reduction size
    HWp = ((HW + 127) // 128) * 128              # lane-dense padded extent

    # Free reshape only -- spatial axis stays on lanes; no NCHW<->NHWC transpose.
    x3 = x_nchw.reshape(N, C, HW)
    y3 = y_nchw.reshape(N, C, HW)
    if HWp != HW:
        # Zero padding keeps the BN sums exact (we divide by the true M) and
        # keeps output stores unmasked / lane-dense.
        pad = ((0, 0), (0, 0), (0, HWp - HW))
        x3 = jnp.pad(x3, pad)
        y3 = jnp.pad(y3, pad)

    w1, w2 = params["w1"], params["w2"]
    g1, be1 = params["g1"], params["be1"]
    g2, be2 = params["g2"], params["be2"]
    g3, be3 = params["g3"], params["be3"]

    cap = _tpu_vmem_capacity()
    per_n_bytes = C * HWp * 4
    resident_bytes = 3 * N * per_n_bytes         # x + y + out fully resident
    # Conservative eligibility: allow for possible double-buffering of the
    # resident arrays plus a few per-sample temporaries and misc headroom.
    fast_ok = (not force_stream) and (
        2 * resident_bytes + 6 * per_n_bytes + (8 << 20) <= int(cap * 0.85))

    w_args = (w1, w2, g1, be1, g2, be2, g3, be3)

    if fast_ok:
        cost = pl.CostEstimate(
            flops=int(8 * M * C * C + 25 * M * C),
            transcendentals=int(M * C),
            bytes_accessed=int(3 * N * C * HWp * 4))
        out3 = pl.pallas_call(
            _make_resident_kernel(N, M),
            out_shape=jax.ShapeDtypeStruct((N, C, HWp), x_nchw.dtype),
            grid=(1,),
            in_specs=[pl.BlockSpec((N, C, HWp), lambda i: (0, 0, 0))] * 2
                     + [pl.BlockSpec((C, C), lambda i: (0, 0))] * 2
                     + [pl.BlockSpec((C, 1), lambda i: (0, 0))] * 6,
            out_specs=pl.BlockSpec((N, C, HWp), lambda i: (0, 0, 0)),
            compiler_params=pltpu.CompilerParams(
                dimension_semantics=("arbitrary",),
                vmem_limit_bytes=int(cap * 0.85)),
            cost_estimate=cost,
        )(x3, y3, *w_args)
    else:
        # Streaming 3-phase path. Blocks are (Nb, C, tile); block_cap bounds the
        # double-buffered VMEM footprint (2 inputs + 1 output, 2 buffers each).
        block_cap = min(4 << 20, max(1 << 20, cap // 16))
        tile = _pick_tile(HWp, C, block_cap)
        Nb = _pick_nb(N, C, tile, block_cap)
        nt = HWp // tile

        xy_spec = pl.BlockSpec((Nb, C, tile), lambda p, n, t: (n, 0, t))
        w_spec = pl.BlockSpec((C, C), lambda p, n, t: (0, 0))       # resident
        v_spec = pl.BlockSpec((C, 1), lambda p, n, t: (0, 0))       # resident

        def out_map(p, n, t):
            # Only advance the output block during the write phase (phase 2);
            # earlier phases never touch the output, so keep its block pinned.
            on = p == 2
            return (jnp.where(on, n, 0), 0, jnp.where(on, t, 0))

        out_spec = pl.BlockSpec((Nb, C, tile), out_map)

        cost = pl.CostEstimate(
            flops=int(12 * M * C * C + 30 * M * C),
            transcendentals=int(2 * M * C),
            bytes_accessed=int(7 * N * C * HWp * 4))

        # TODO(synk): v7x megacore split (per-core partial BN stats + combine).
        out3 = pl.pallas_call(
            _make_stream_kernel(M, Nb),
            out_shape=jax.ShapeDtypeStruct((N, C, HWp), x_nchw.dtype),
            grid=(3, N // Nb, nt),
            in_specs=[xy_spec, xy_spec, w_spec, w_spec,
                      v_spec, v_spec, v_spec, v_spec, v_spec, v_spec],
            out_specs=out_spec,
            scratch_shapes=[pltpu.VMEM((C, 1), jnp.float32)] * 6,
            compiler_params=pltpu.CompilerParams(
                dimension_semantics=("arbitrary", "arbitrary", "arbitrary"),
                vmem_limit_bytes=int(min(cap * 0.8, 64 << 20))),
            cost_estimate=cost,
        )(x3, y3, *w_args)

    if HWp != HW:
        out3 = out3[..., :HW]
    return out3.reshape(N, C, H, W)


# ----------------------------------------------------------------------------
# Synthetic params + pure-JAX reference
# ----------------------------------------------------------------------------
def init_params(key, dims):
    """Synthetic params matching the PyTorch Gated(dims) module shapes.

    Conv2d(dims, dims, 1): weight (out, in) [1x1 kernel squeezed], bias (out,).
    BatchNorm2d defaults: weight=1, bias=0."""
    k1, k2, k3, k4 = jax.random.split(key, 4)
    bound = dims ** -0.5
    w1 = jax.random.uniform(k1, (dims, dims), jnp.float32, -bound, bound)
    b1 = jax.random.uniform(k2, (dims, 1), jnp.float32, -bound, bound)
    w2 = jax.random.uniform(k3, (dims, dims), jnp.float32, -bound, bound)
    b2 = jax.random.uniform(k4, (dims, 1), jnp.float32, -bound, bound)
    ones = jnp.ones((dims, 1), jnp.float32)
    zeros = jnp.zeros((dims, 1), jnp.float32)
    return {"w1": w1, "b1": b1, "g1": ones, "be1": zeros,
            "w2": w2, "b2": b2, "g2": ones, "be2": zeros,
            "g3": ones, "be3": zeros}


def gated_reference(x, y, p):
    """Pure-JAX reference (includes the conv biases; kernel drops them since a
    constant per-channel shift cancels exactly under training-mode BN)."""
    def bn(a, g, b):
        mu = a.mean(axis=(0, 2, 3), keepdims=True)
        var = ((a - mu) ** 2).mean(axis=(0, 2, 3), keepdims=True)
        return (g.reshape(1, -1, 1, 1) * (a - mu) / jnp.sqrt(var + EPS)
                + b.reshape(1, -1, 1, 1))

    a1 = jnp.einsum('oc,nchw->nohw', p["w1"], x) + p["b1"].reshape(1, -1, 1, 1)
    a2 = jnp.einsum('oc,nchw->nohw', p["w2"], y) + p["b2"].reshape(1, -1, 1, 1)
    z1 = jax.nn.relu(bn(a1, p["g1"], p["be1"]))
    z2 = jax.nn.relu(bn(a2, p["g2"], p["be2"]))
    z = jax.nn.sigmoid(z1 + z2)
    res = x * z + y * (1.0 - z)
    return bn(res, p["g3"], p["be3"])


if __name__ == "__main__":
    N, C, H, W = 2, 4, 16, 16
    key = jax.random.PRNGKey(0)
    kx, ky, kp = jax.random.split(key, 3)
    x = jax.random.normal(kx, (N, C, H, W), jnp.float32)
    y = jax.random.normal(ky, (N, C, H, W), jnp.float32)
    params = init_params(kp, C)

    ref = jax.block_until_ready(gated_reference(x, y, params))

    # Exercise both paths: VMEM-resident fast path (default for this size) and
    # the tiled 3-phase streaming path (forced).
    out_fast = jax.block_until_ready(gated_forward(x, y, params))
    out_stream = jax.block_until_ready(gated_forward(x, y, params,
                                                     force_stream=True))

    for name, out in (("fast", out_fast), ("stream", out_stream)):
        assert out.shape == (N, C, H, W)
        err = float(jnp.max(jnp.abs(out - ref)))
        assert err < 5e-4, f"{name} path mismatch vs reference: max abs err = {err}"
    print("KERNEL_OK")
</pallas_src>

<mosaic_0001>
module attributes {stable_mosaic.version = 11 : i64} {
  func.func @kernel(%arg0: i32, %arg1: memref<2x4x256xf32, #tpu.memory_space<vmem>>, %arg2: memref<2x4x256xf32, #tpu.memory_space<vmem>>, %arg3: memref<4x4xf32, #tpu.memory_space<vmem>>, %arg4: memref<4x4xf32, #tpu.memory_space<vmem>>, %arg5: memref<4x1xf32, #tpu.memory_space<vmem>>, %arg6: memref<4x1xf32, #tpu.memory_space<vmem>>, %arg7: memref<4x1xf32, #tpu.memory_space<vmem>>, %arg8: memref<4x1xf32, #tpu.memory_space<vmem>>, %arg9: memref<4x1xf32, #tpu.memory_space<vmem>>, %arg10: memref<4x1xf32, #tpu.memory_space<vmem>>, %arg11: memref<2x4x256xf32, #tpu.memory_space<vmem>>) attributes {dimension_semantics = [#tpu.dimension_semantics<arbitrary>], iteration_bounds = array<i64: 1>, scalar_prefetch = 0 : i64, scratch_operands = 0 : i64, tpu.core_type = #tpu.core_type<tc>, window_params = [{pipeline_mode = #tpu.pipeline_mode<synchronous>, transform_indices = @transform_0, window_bounds = array<i64: 2, 4, 256>}, {pipeline_mode = #tpu.pipeline_mode<synchronous>, transform_indices = @transform_1, window_bounds = array<i64: 2, 4, 256>}, {pipeline_mode = #tpu.pipeline_mode<synchronous>, transform_indices = @transform_2, window_bounds = array<i64: 4, 4>}, {pipeline_mode = #tpu.pipeline_mode<synchronous>, transform_indices = @transform_3, window_bounds = array<i64: 4, 4>}, {pipeline_mode = #tpu.pipeline_mode<synchronous>, transform_indices = @transform_4, window_bounds = array<i64: 4, 1>}, {pipeline_mode = #tpu.pipeline_mode<synchronous>, transform_indices = @transform_5, window_bounds = array<i64: 4, 1>}, {pipeline_mode = #tpu.pipeline_mode<synchronous>, transform_indices = @transform_6, window_bounds = array<i64: 4, 1>}, {pipeline_mode = #tpu.pipeline_mode<synchronous>, transform_indices = @transform_7, window_bounds = array<i64: 4, 1>}, {pipeline_mode = #tpu.pipeline_mode<synchronous>, transform_indices = @transform_8, window_bounds = array<i64: 4, 1>}, {pipeline_mode = #tpu.pipeline_mode<synchronous>, transform_indices = @transform_9, window_bounds = array<i64: 4, 1>}, {pipeline_mode = #tpu.pipeline_mode<synchronous>, transform_indices = @transform_10, window_bounds = array<i64: 2, 4, 256>}]} {
    %c0 = arith.constant 0 : index
    %c0_0 = arith.constant 0 : index
    %0 = vector.load %arg3[%c0, %c0_0] : memref<4x4xf32, #tpu.memory_space<vmem>>, vector<4x4xf32>
    %c0_1 = arith.constant 0 : index
    %c0_2 = arith.constant 0 : index
    %1 = vector.load %arg4[%c0_1, %c0_2] : memref<4x4xf32, #tpu.memory_space<vmem>>, vector<4x4xf32>
    %cst = arith.constant 0.000000e+00 : f32
    %2 = vector.broadcast %cst : f32 to vector<4x1xf32>
    %cst_3 = arith.constant 0.000000e+00 : f32
    %3 = vector.broadcast %cst_3 : f32 to vector<4x1xf32>
    %cst_4 = arith.constant 0.000000e+00 : f32
    %4 = vector.broadcast %cst_4 : f32 to vector<4x1xf32>
    %cst_5 = arith.constant 0.000000e+00 : f32
    %5 = vector.broadcast %cst_5 : f32 to vector<4x1xf32>
    %c0_6 = arith.constant 0 : index
    %c0_7 = arith.constant 0 : index
    %c0_8 = arith.constant 0 : index
    %6 = vector.load %arg1[%c0_6, %c0_7, %c0_8] : memref<2x4x256xf32, #tpu.memory_space<vmem>>, vector<1x4x256xf32>
    %7 = vector.shape_cast %6 : vector<1x4x256xf32> to vector<4x256xf32>
    %cst_9 = arith.constant dense<0.000000e+00> : vector<4x256xf32>
    %8 = tpu.matmul %0, %7, %cst_9 {dimension_numbers = #tpu.dot_dimension_numbers<[1], [0], [0], [1], [0, 0, 1, 1], [], []>} : vector<4x4xf32>, vector<4x256xf32>, vector<4x256xf32> -> vector<4x256xf32>
    %c0_10 = arith.constant 0 : index
    %c0_11 = arith.constant 0 : index
    %c0_12 = arith.constant 0 : index
    %9 = vector.load %arg2[%c0_10, %c0_11, %c0_12] : memref<2x4x256xf32, #tpu.memory_space<vmem>>, vector<1x4x256xf32>
    %10 = vector.shape_cast %9 : vector<1x4x256xf32> to vector<4x256xf32>
    %cst_13 = arith.constant dense<0.000000e+00> : vector<4x256xf32>
    %11 = tpu.matmul %1, %10, %cst_13 {dimension_numbers = #tpu.dot_dimension_numbers<[1], [0], [0], [1], [0, 0, 1, 1], [], []>} : vector<4x4xf32>, vector<4x256xf32>, vector<4x256xf32> -> vector<4x256xf32>
    %cst_14 = arith.constant dense<0.000000e+00> : vector<4xf32>
    %12 = vector.multi_reduction <add>, %8, %cst_14 [1] : vector<4x256xf32> to vector<4xf32>
    %13 = vector.shape_cast %12 : vector<4xf32> to vector<4x1xf32>
    %14 = arith.addf %2, %13 : vector<4x1xf32>
    %15 = arith.mulf %8, %8 : vector<4x256xf32>
    %cst_15 = arith.constant dense<0.000000e+00> : vector<4xf32>
    %16 = vector.multi_reduction <add>, %15, %cst_15 [1] : vector<4x256xf32> to vector<4xf32>
    %17 = vector.shape_cast %16 : vector<4xf32> to vector<4x1xf32>
    %18 = arith.addf %3, %17 : vector<4x1xf32>
    %cst_16 = arith.constant dense<0.000000e+00> : vector<4xf32>
    %19 = vector.multi_reduction <add>, %11, %cst_16 [1] : vector<4x256xf32> to vector<4xf32>
    %20 = vector.shape_cast %19 : vector<4xf32> to vector<4x1xf32>
    %21 = arith.addf %4, %20 : vector<4x1xf32>
    %22 = arith.mulf %11, %11 : vector<4x256xf32>
    %cst_17 = arith.constant dense<0.000000e+00> : vector<4xf32>
    %23 = vector.multi_reduction <add>, %22, %cst_17 [1] : vector<4x256xf32> to vector<4xf32>
    %24 = vector.shape_cast %23 : vector<4xf32> to vector<4x1xf32>
    %25 = arith.addf %5, %24 : vector<4x1xf32>
    %c1 = arith.constant 1 : index
    %c0_18 = arith.constant 0 : index
    %c0_19 = arith.constant 0 : index
    %26 = vector.load %arg1[%c1, %c0_18, %c0_19] : memref<2x4x256xf32, #tpu.memory_space<vmem>>, vector<1x4x256xf32>
    %27 = vector.shape_cast %26 : vector<1x4x256xf32> to vector<4x256xf32>
    %cst_20 = arith.constant dense<0.000000e+00> : vector<4x256xf32>
    %28 = tpu.matmul %0, %27, %cst_20 {dimension_numbers = #tpu.dot_dimension_numbers<[1], [0], [0], [1], [0, 0, 1, 1], [], []>} : vector<4x4xf32>, vector<4x256xf32>, vector<4x256xf32> -> vector<4x256xf32>
    %c1_21 = arith.constant 1 : index
    %c0_22 = arith.constant 0 : index
    %c0_23 = arith.constant 0 : index
    %29 = vector.load %arg2[%c1_21, %c0_22, %c0_23] : memref<2x4x256xf32, #tpu.memory_space<vmem>>, vector<1x4x256xf32>
    %30 = vector.shape_cast %29 : vector<1x4x256xf32> to vector<4x256xf32>
    %cst_24 = arith.constant dense<0.000000e+00> : vector<4x256xf32>
    %31 = tpu.matmul %1, %30, %cst_24 {dimension_numbers = #tpu.dot_dimension_numbers<[1], [0], [0], [1], [0, 0, 1, 1], [], []>} : vector<4x4xf32>, vector<4x256xf32>, vector<4x256xf32> -> vector<4x256xf32>
    %cst_25 = arith.constant dense<0.000000e+00> : vector<4xf32>
    %32 = vector.multi_reduction <add>, %28, %cst_25 [1] : vector<4x256xf32> to vector<4xf32>
    %33 = vector.shape_cast %32 : vector<4xf32> to vector<4x1xf32>
    %34 = arith.addf %14, %33 : vector<4x1xf32>
    %35 = arith.mulf %28, %28 : vector<4x256xf32>
    %cst_26 = arith.constant dense<0.000000e+00> : vector<4xf32>
    %36 = vector.multi_reduction <add>, %35, %cst_26 [1] : vector<4x256xf32> to vector<4xf32>
    %37 = vector.shape_cast %36 : vector<4xf32> to vector<4x1xf32>
    %38 = arith.addf %18, %37 : vector<4x1xf32>
    %cst_27 = arith.constant dense<0.000000e+00> : vector<4xf32>
    %39 = vector.multi_reduction <add>, %31, %cst_27 [1] : vector<4x256xf32> to vector<4xf32>
    %40 = vector.shape_cast %39 : vector<4xf32> to vector<4x1xf32>
    %41 = arith.addf %21, %40 : vector<4x1xf32>
    %42 = arith.mulf %31, %31 : vector<4x256xf32>
    %cst_28 = arith.constant dense<0.000000e+00> : vector<4xf32>
    %43 = vector.multi_reduction <add>, %42, %cst_28 [1] : vector<4x256xf32> to vector<4xf32>
    %44 = vector.shape_cast %43 : vector<4xf32> to vector<4x1xf32>
    %45 = arith.addf %25, %44 : vector<4x1xf32>
    %c0_29 = arith.constant 0 : index
    %c0_30 = arith.constant 0 : index
    %46 = vector.load %arg5[%c0_29, %c0_30] : memref<4x1xf32, #tpu.memory_space<vmem>>, vector<4x1xf32>
    %c0_31 = arith.constant 0 : index
    %c0_32 = arith.constant 0 : index
    %47 = vector.load %arg6[%c0_31, %c0_32] : memref<4x1xf32, #tpu.memory_space<vmem>>, vector<4x1xf32>
    %cst_33 = arith.constant 0.001953125 : f32
    %48 = vector.broadcast %cst_33 : f32 to vector<4x1xf32>
    %49 = arith.mulf %34, %48 : vector<4x1xf32>
    %cst_34 = arith.constant 0.001953125 : f32
    %50 = vector.broadcast %cst_34 : f32 to vector<4x1xf32>
    %51 = arith.mulf %38, %50 : vector<4x1xf32>
    %52 = arith.mulf %49, %49 : vector<4x1xf32>
    %53 = arith.subf %51, %52 : vector<4x1xf32>
    %cst_35 = arith.constant 9.99999974E-6 : f32
    %54 = vector.broadcast %cst_35 : f32 to vector<4x1xf32>
    %55 = arith.addf %53, %54 : vector<4x1xf32>
    %56 = math.rsqrt %55 : vector<4x1xf32>
    %57 = arith.mulf %46, %56 : vector<4x1xf32>
    %58 = arith.mulf %49, %57 : vector<4x1xf32>
    %59 = arith.subf %47, %58 : vector<4x1xf32>
    %c0_36 = arith.constant 0 : index
    %c0_37 = arith.constant 0 : index
    %60 = vector.load %arg7[%c0_36, %c0_37] : memref<4x1xf32, #tpu.memory_space<vmem>>, vector<4x1xf32>
    %c0_38 = arith.constant 0 : index
    %c0_39 = arith.constant 0 : index
    %61 = vector.load %arg8[%c0_38, %c0_39] : memref<4x1xf32, #tpu.memory_space<vmem>>, vector<4x1xf32>
    %cst_40 = arith.constant 0.001953125 : f32
    %62 = vector.broadcast %cst_40 : f32 to vector<4x1xf32>
    %63 = arith.mulf %41, %62 : vector<4x1xf32>
    %cst_41 = arith.constant 0.001953125 : f32
    %64 = vector.broadcast %cst_41 : f32 to vector<4x1xf32>
    %65 = arith.mulf %45, %64 : vector<4x1xf32>
    %66 = arith.mulf %63, %63 : vector<4x1xf32>
    %67 = arith.subf %65, %66 : vector<4x1xf32>
    %cst_42 = arith.constant 9.99999974E-6 : f32
    %68 = vector.broadcast %cst_42 : f32 to vector<4x1xf32>
    %69 = arith.addf %67, %68 : vector<4x1xf32>
    %70 = math.rsqrt %69 : vector<4x1xf32>
    %71 = arith.mulf %60, %70 : vector<4x1xf32>
    %72 = arith.mulf %63, %71 : vector<4x1xf32>
    %73 = arith.subf %61, %72 : vector<4x1xf32>
    %cst_43 = arith.constant 0.000000e+00 : f32
    %74 = vector.broadcast %cst_43 : f32 to vector<4x1xf32>
    %cst_44 = arith.constant 0.000000e+00 : f32
    %75 = vector.broadcast %cst_44 : f32 to vector<4x1xf32>
    %c0_45 = arith.constant 0 : index
    %c0_46 = arith.constant 0 : index
    %c0_47 = arith.constant 0 : index
    %76 = vector.load %arg1[%c0_45, %c0_46, %c0_47] : memref<2x4x256xf32, #tpu.memory_space<vmem>>, vector<1x4x256xf32>
    %77 = vector.shape_cast %76 : vector<1x4x256xf32> to vector<4x256xf32>
    %c0_48 = arith.constant 0 : index
    %c0_49 = arith.constant 0 : index
    %c0_50 = arith.constant 0 : index
    %78 = vector.load %arg2[%c0_48, %c0_49, %c0_50] : memref<2x4x256xf32, #tpu.memory_space<vmem>>, vector<1x4x256xf32>
    %79 = vector.shape_cast %78 : vector<1x4x256xf32> to vector<4x256xf32>
    %cst_51 = arith.constant dense<0.000000e+00> : vector<4x256xf32>
    %80 = tpu.matmul %0, %77, %cst_51 {dimension_numbers = #tpu.dot_dimension_numbers<[1], [0], [0], [1], [0, 0, 1, 1], [], []>} : vector<4x4xf32>, vector<4x256xf32>, vector<4x256xf32> -> vector<4x256xf32>
    %cst_52 = arith.constant dense<0.000000e+00> : vector<4x256xf32>
    %81 = tpu.matmul %1, %79, %cst_52 {dimension_numbers = #tpu.dot_dimension_numbers<[1], [0], [0], [1], [0, 0, 1, 1], [], []>} : vector<4x4xf32>, vector<4x256xf32>, vector<4x256xf32> -> vector<4x256xf32>
    %82 = vector.broadcast %57 : vector<4x1xf32> to vector<4x256xf32>
    %83 = arith.mulf %80, %82 : vector<4x256xf32>
    %84 = vector.broadcast %59 : vector<4x1xf32> to vector<4x256xf32>
    %85 = arith.addf %83, %84 : vector<4x256xf32>
    %cst_53 = arith.constant 0.000000e+00 : f32
    %86 = vector.broadcast %cst_53 : f32 to vector<4x256xf32>
    %87 = arith.maximumf %85, %86 : vector<4x256xf32>
    %88 = vector.broadcast %71 : vector<4x1xf32> to vector<4x256xf32>
    %89 = arith.mulf %81, %88 : vector<4x256xf32>
    %90 = vector.broadcast %73 : vector<4x1xf32> to vector<4x256xf32>
    %91 = arith.addf %89, %90 : vector<4x256xf32>
    %cst_54 = arith.constant 0.000000e+00 : f32
    %92 = vector.broadcast %cst_54 : f32 to vector<4x256xf32>
    %93 = arith.maximumf %91, %92 : vector<4x256xf32>
    %94 = arith.addf %87, %93 : vector<4x256xf32>
    %cst_55 = arith.constant 5.000000e-01 : f32
    %95 = vector.broadcast %cst_55 : f32 to vector<4x256xf32>
    %96 = arith.mulf %95, %94 : vector<4x256xf32>
    %97 = math.tanh %96 : vector<4x256xf32>
    %cst_56 = arith.constant 1.000000e+00 : f32
    %98 = vector.broadcast %cst_56 : f32 to vector<4x256xf32>
    %99 = arith.addf %97, %98 : vector<4x256xf32>
    %cst_57 = arith.constant 5.000000e-01 : f32
    %100 = vector.broadcast %cst_57 : f32 to vector<4x256xf32>
    %101 = arith.mulf %100, %99 : vector<4x256xf32>
    %102 = arith.subf %77, %79 : vector<4x256xf32>
    %103 = arith.mulf %101, %102 : vector<4x256xf32>
    %104 = arith.addf %79, %103 : vector<4x256xf32>
    %cst_58 = arith.constant dense<0.000000e+00> : vector<4xf32>
    %105 = vector.multi_reduction <add>, %104, %cst_58 [1] : vector<4x256xf32> to vector<4xf32>
    %106 = vector.shape_cast %105 : vector<4xf32> to vector<4x1xf32>
    %107 = arith.addf %74, %106 : vector<4x1xf32>
    %108 = arith.mulf %104, %104 : vector<4x256xf32>
    %cst_59 = arith.constant dense<0.000000e+00> : vector<4xf32>
    %109 = vector.multi_reduction <add>, %108, %cst_59 [1] : vector<4x256xf32> to vector<4xf32>
    %110 = vector.shape_cast %109 : vector<4xf32> to vector<4x1xf32>
    %111 = arith.addf %75, %110 : vector<4x1xf32>
    %c0_60 = arith.constant 0 : index
    %c0_61 = arith.constant 0 : index
    %c0_62 = arith.constant 0 : index
    %112 = vector.load %arg11[%c0_60, %c0_61, %c0_62] : memref<2x4x256xf32, #tpu.memory_space<vmem>>, vector<1x4x256xf32>
    %113 = vector.shape_cast %112 : vector<1x4x256xf32> to vector<4x256xf32>
    %114 = vector.shape_cast %104 : vector<4x256xf32> to vector<1x4x256xf32>
    tpu.vector_store %arg11[%c0_60, %c0_61, %c0_62], %114 {strides = array<i32>} : memref<2x4x256xf32, #tpu.memory_space<vmem>>, vector<1x4x256xf32>,
    %c1_63 = arith.constant 1 : index
    %c0_64 = arith.constant 0 : index
    %c0_65 = arith.constant 0 : index
    %115 = vector.load %arg1[%c1_63, %c0_64, %c0_65] : memref<2x4x256xf32, #tpu.memory_space<vmem>>, vector<1x4x256xf32>
    %116 = vector.shape_cast %115 : vector<1x4x256xf32> to vector<4x256xf32>
    %c1_66 = arith.constant 1 : index
    %c0_67 = arith.constant 0 : index
    %c0_68 = arith.constant 0 : index
    %117 = vector.load %arg2[%c1_66, %c0_67, %c0_68] : memref<2x4x256xf32, #tpu.memory_space<vmem>>, vector<1x4x256xf32>
    %118 = vector.shape_cast %117 : vector<1x4x256xf32> to vector<4x256xf32>
    %cst_69 = arith.constant dense<0.000000e+00> : vector<4x256xf32>
    %119 = tpu.matmul %0, %116, %cst_69 {dimension_numbers = #tpu.dot_dimension_numbers<[1], [0], [0], [1], [0, 0, 1, 1], [], []>} : vector<4x4xf32>, vector<4x256xf32>, vector<4x256xf32> -> vector<4x256xf32>
    %cst_70 = arith.constant dense<0.000000e+00> : vector<4x256xf32>
    %120 = tpu.matmul %1, %118, %cst_70 {dimension_numbers = #tpu.dot_dimension_numbers<[1], [0], [0], [1], [0, 0, 1, 1], [], []>} : vector<4x4xf32>, vector<4x256xf32>, vector<4x256xf32> -> vector<4x256xf32>
    %121 = vector.broadcast %57 : vector<4x1xf32> to vector<4x256xf32>
    %122 = arith.mulf %119, %121 : vector<4x256xf32>
    %123 = vector.broadcast %59 : vector<4x1xf32> to vector<4x256xf32>
    %124 = arith.addf %122, %123 : vector<4x256xf32>
    %cst_71 = arith.constant 0.000000e+00 : f32
    %125 = vector.broadcast %cst_71 : f32 to vector<4x256xf32>
    %126 = arith.maximumf %124, %125 : vector<4x256xf32>
    %127 = vector.broadcast %71 : vector<4x1xf32> to vector<4x256xf32>
    %128 = arith.mulf %120, %127 : vector<4x256xf32>
    %129 = vector.broadcast %73 : vector<4x1xf32> to vector<4x256xf32>
    %130 = arith.addf %128, %129 : vector<4x256xf32>
    %cst_72 = arith.constant 0.000000e+00 : f32
    %131 = vector.broadcast %cst_72 : f32 to vector<4x256xf32>
    %132 = arith.maximumf %130, %131 : vector<4x256xf32>
    %133 = arith.addf %126, %132 : vector<4x256xf32>
    %cst_73 = arith.constant 5.000000e-01 : f32
    %134 = vector.broadcast %cst_73 : f32 to vector<4x256xf32>
    %135 = arith.mulf %134, %133 : vector<4x256xf32>
    %136 = math.tanh %135 : vector<4x256xf32>
    %cst_74 = arith.constant 1.000000e+00 : f32
    %137 = vector.broadcast %cst_74 : f32 to vector<4x256xf32>
    %138 = arith.addf %136, %137 : vector<4x256xf32>
    %cst_75 = arith.constant 5.000000e-01 : f32
    %139 = vector.broadcast %cst_75 : f32 to vector<4x256xf32>
    %140 = arith.mulf %139, %138 : vector<4x256xf32>
    %141 = arith.subf %116, %118 : vector<4x256xf32>
    %142 = arith.mulf %140, %141 : vector<4x256xf32>
    %143 = arith.addf %118, %142 : vector<4x256xf32>
    %cst_76 = arith.constant dense<0.000000e+00> : vector<4xf32>
    %144 = vector.multi_reduction <add>, %143, %cst_76 [1] : vector<4x256xf32> to vector<4xf32>
    %145 = vector.shape_cast %144 : vector<4xf32> to vector<4x1xf32>
    %146 = arith.addf %107, %145 : vector<4x1xf32>
    %147 = arith.mulf %143, %143 : vector<4x256xf32>
    %cst_77 = arith.constant dense<0.000000e+00> : vector<4xf32>
    %148 = vector.multi_reduction <add>, %147, %cst_77 [1] : vector<4x256xf32> to vector<4xf32>
    %149 = vector.shape_cast %148 : vector<4xf32> to vector<4x1xf32>
    %150 = arith.addf %111, %149 : vector<4x1xf32>
    %c1_78 = arith.constant 1 : index
    %c0_79 = arith.constant 0 : index
    %c0_80 = arith.constant 0 : index
    %151 = vector.load %arg11[%c1_78, %c0_79, %c0_80] : memref<2x4x256xf32, #tpu.memory_space<vmem>>, vector<1x4x256xf32>
    %152 = vector.shape_cast %151 : vector<1x4x256xf32> to vector<4x256xf32>
    %153 = vector.shape_cast %143 : vector<4x256xf32> to vector<1x4x256xf32>
    tpu.vector_store %arg11[%c1_78, %c0_79, %c0_80], %153 {strides = array<i32>} : memref<2x4x256xf32, #tpu.memory_space<vmem>>, vector<1x4x256xf32>,
    %c0_81 = arith.constant 0 : index
    %c0_82 = arith.constant 0 : index
    %154 = vector.load %arg9[%c0_81, %c0_82] : memref<4x1xf32, #tpu.memory_space<vmem>>, vector<4x1xf32>
    %c0_83 = arith.constant 0 : index
    %c0_84 = arith.constant 0 : index
    %155 = vector.load %arg10[%c0_83, %c0_84] : memref<4x1xf32, #tpu.memory_space<vmem>>, vector<4x1xf32>
    %cst_85 = arith.constant 0.001953125 : f32
    %156 = vector.broadcast %cst_85 : f32 to vector<4x1xf32>
    %157 = arith.mulf %146, %156 : vector<4x1xf32>
    %cst_86 = arith.constant 0.001953125 : f32
    %158 = vector.broadcast %cst_86 : f32 to vector<4x1xf32>
    %159 = arith.mulf %150, %158 : vector<4x1xf32>
    %160 = arith.mulf %157, %157 : vector<4x1xf32>
    %161 = arith.subf %159, %160 : vector<4x1xf32>
    %cst_87 = arith.constant 9.99999974E-6 : f32
    %162 = vector.broadcast %cst_87 : f32 to vector<4x1xf32>
    %163 = arith.addf %161, %162 : vector<4x1xf32>
    %164 = math.rsqrt %163 : vector<4x1xf32>
    %165 = arith.mulf %154, %164 : vector<4x1xf32>
    %166 = arith.mulf %157, %165 : vector<4x1xf32>
    %167 = arith.subf %155, %166 : vector<4x1xf32>
    %c0_88 = arith.constant 0 : index
    %c0_89 = arith.constant 0 : index
    %c0_90 = arith.constant 0 : index
    %168 = vector.load %arg11[%c0_88, %c0_89, %c0_90] : memref<2x4x256xf32, #tpu.memory_space<vmem>>, vector<1x4x256xf32>
    %169 = vector.shape_cast %168 : vector<1x4x256xf32> to vector<4x256xf32>
    %170 = vector.broadcast %165 : vector<4x1xf32> to vector<4x256xf32>
    %171 = arith.mulf %169, %170 : vector<4x256xf32>
    %172 = vector.broadcast %167 : vector<4x1xf32> to vector<4x256xf32>
    %173 = arith.addf %171, %172 : vector<4x256xf32>
    %c0_91 = arith.constant 0 : index
    %c0_92 = arith.constant 0 : index
    %c0_93 = arith.constant 0 : index
    %174 = vector.load %arg11[%c0_91, %c0_92, %c0_93] : memref<2x4x256xf32, #tpu.memory_space<vmem>>, vector<1x4x256xf32>
    %175 = vector.shape_cast %174 : vector<1x4x256xf32> to vector<4x256xf32>
    %176 = vector.shape_cast %173 : vector<4x256xf32> to vector<1x4x256xf32>
    tpu.vector_store %arg11[%c0_91, %c0_92, %c0_93], %176 {strides = array<i32>} : memref<2x4x256xf32, #tpu.memory_space<vmem>>, vector<1x4x256xf32>,
    %c1_94 = arith.constant 1 : index
    %c0_95 = arith.constant 0 : index
    %c0_96 = arith.constant 0 : index
    %177 = vector.load %arg11[%c1_94, %c0_95, %c0_96] : memref<2x4x256xf32, #tpu.memory_space<vmem>>, vector<1x4x256xf32>
    %178 = vector.shape_cast %177 : vector<1x4x256xf32> to vector<4x256xf32>
    %179 = vector.broadcast %165 : vector<4x1xf32> to vector<4x256xf32>
    %180 = arith.mulf %178, %179 : vector<4x256xf32>
    %181 = vector.broadcast %167 : vector<4x1xf32> to vector<4x256xf32>
    %182 = arith.addf %180, %181 : vector<4x256xf32>
    %c1_97 = arith.constant 1 : index
    %c0_98 = arith.constant 0 : index
    %c0_99 = arith.constant 0 : index
    %183 = vector.load %arg11[%c1_97, %c0_98, %c0_99] : memref<2x4x256xf32, #tpu.memory_space<vmem>>, vector<1x4x256xf32>
    %184 = vector.shape_cast %183 : vector<1x4x256xf32> to vector<4x256xf32>
    %185 = vector.shape_cast %182 : vector<4x256xf32> to vector<1x4x256xf32>
    tpu.vector_store %arg11[%c1_97, %c0_98, %c0_99], %185 {strides = array<i32>} : memref<2x4x256xf32, #tpu.memory_space<vmem>>, vector<1x4x256xf32>,
    return
  }
  func.func @transform_0(%arg0: i32) -> (i32, i32, i32) {
    %c0_i32 = arith.constant 0 : i32
    %c0_i32_0 = arith.constant 0 : i32
    %c0_i32_1 = arith.constant 0 : i32
    %c0_i32_2 = arith.constant 0 : i32
    return %c0_i32, %c0_i32_0, %c0_i32_1 : i32, i32, i32
  }
  func.func @transform_1(%arg0: i32) -> (i32, i32, i32) {
    %c0_i32 = arith.constant 0 : i32
    %c0_i32_0 = arith.constant 0 : i32
    %c0_i32_1 = arith.constant 0 : i32
    %c0_i32_2 = arith.constant 0 : i32
    return %c0_i32, %c0_i32_0, %c0_i32_1 : i32, i32, i32
  }
  func.func @transform_2(%arg0: i32) -> (i32, i32) {
    %c0_i32 = arith.constant 0 : i32
    %c0_i32_0 = arith.constant 0 : i32
    %c0_i32_1 = arith.constant 0 : i32
    return %c0_i32, %c0_i32_0 : i32, i32
  }
  func.func @transform_3(%arg0: i32) -> (i32, i32) {
    %c0_i32 = arith.constant 0 : i32
    %c0_i32_0 = arith.constant 0 : i32
    %c0_i32_1 = arith.constant 0 : i32
    return %c0_i32, %c0_i32_0 : i32, i32
  }
  func.func @transform_4(%arg0: i32) -> (i32, i32) {
    %c0_i32 = arith.constant 0 : i32
    %c0_i32_0 = arith.constant 0 : i32
    %c0_i32_1 = arith.constant 0 : i32
    return %c0_i32, %c0_i32_0 : i32, i32
  }
  func.func @transform_5(%arg0: i32) -> (i32, i32) {
    %c0_i32 = arith.constant 0 : i32
    %c0_i32_0 = arith.constant 0 : i32
    %c0_i32_1 = arith.constant 0 : i32
    return %c0_i32, %c0_i32_0 : i32, i32
  }
  func.func @transform_6(%arg0: i32) -> (i32, i32) {
    %c0_i32 = arith.constant 0 : i32
    %c0_i32_0 = arith.constant 0 : i32
    %c0_i32_1 = arith.constant 0 : i32
    return %c0_i32, %c0_i32_0 : i32, i32
  }
  func.func @transform_7(%arg0: i32) -> (i32, i32) {
    %c0_i32 = arith.constant 0 : i32
    %c0_i32_0 = arith.constant 0 : i32
    %c0_i32_1 = arith.constant 0 : i32
    return %c0_i32, %c0_i32_0 : i32, i32
  }
  func.func @transform_8(%arg0: i32) -> (i32, i32) {
    %c0_i32 = arith.constant 0 : i32
    %c0_i32_0 = arith.constant 0 : i32
    %c0_i32_1 = arith.constant 0 : i32
    return %c0_i32, %c0_i32_0 : i32, i32
  }
  func.func @transform_9(%arg0: i32) -> (i32, i32) {
    %c0_i32 = arith.constant 0 : i32
    %c0_i32_0 = arith.constant 0 : i32
    %c0_i32_1 = arith.constant 0 : i32
    return %c0_i32, %c0_i32_0 : i32, i32
  }
  func.func @transform_10(%arg0: i32) -> (i32, i32, i32) {
    %c0_i32 = arith.constant 0 : i32
    %c0_i32_0 = arith.constant 0 : i32
    %c0_i32_1 = arith.constant 0 : i32
    %c0_i32_2 = arith.constant 0 : i32
    return %c0_i32, %c0_i32_0, %c0_i32_1 : i32, i32, i32
  }
}

</mosaic_0001>

<llo_original>
// kernel: tpu_custom_call.1
$region0: #{tpu_custom_call.1}
  #allocation0 [shape = 'u32[]', space=smem, size = 0x4, offset = 0x4, fixed_abs, tag = 'smem constant byte address 0x4 - core index']
  #allocation1 [shape = 'u32[72,128]{1,0:T(1,128)}', space=vmem, size = 0x9000, scoped, tag = 'internal scratch']
  %s0 = inlined_call_operand.vmem [shape: f32[2,4,256], index: 0, kind: input, shape index: {}]
  %s1 = inlined_call_operand.hbm [shape: f32[2,4,256], index: 1, kind: input, shape index: {}]
  %s2 = inlined_call_operand.vmem [shape: f32[4,4], index: 2, kind: input, shape index: {}]
  %s3 = inlined_call_operand.vmem [shape: f32[4,4], index: 3, kind: input, shape index: {}]
  %s4 = inlined_call_operand.vmem [shape: f32[4,1], index: 4, kind: input, shape index: {}]
  %s5 = inlined_call_operand.vmem [shape: f32[4,1], index: 5, kind: input, shape index: {}]
  %s6 = inlined_call_operand.vmem [shape: f32[4,1], index: 6, kind: input, shape index: {}]
  %s7 = inlined_call_operand.vmem [shape: f32[4,1], index: 7, kind: input, shape index: {}]
  %s8 = inlined_call_operand.vmem [shape: f32[4,1], index: 8, kind: input, shape index: {}]
  %s9 = inlined_call_operand.vmem [shape: f32[4,1], index: 9, kind: input, shape index: {}]
  %s10 = inlined_call_operand.hbm [shape: f32[2,4,256], index: 10, kind: output, shape index: {}]
  %s11 = sld [smem:[#allocation0]]
  $region54: #{tpu_custom_call.1} parent=0
    _
  %s13 = ssub.s32 1, %s11
  %s14 = scalar_select 0, %s13, %s11
  $region1: #{tpu_custom_call.1} parent=0
    #allocation2 [shape = 'u8[8192]{0}', space=vmem, size = 0x2000, scoped, tag = 'input window, operand 1, single buffered']
    #allocation3 [shape = 's32[1]{0}', space=sflag, size = 0x4, scoped, tag = 'scoped memory for tpu_custom_call.1']
    #allocation4 [shape = 's32[1]{0}', space=sflag, size = 0x4, scoped, tag = 'scoped memory for tpu_custom_call.1']
    #allocation5 [shape = 'u8[8192]{0}', space=vmem, size = 0x2000, scoped, tag = 'output window, operand 0, single buffered']
    %15 = vsyncpa [#allocation3], 0
    %16 = vsyncpa [#allocation4], 0
    // Predicated region
    $region2: #{tpu_custom_call.1} parent=1 // pred_check
      _
    $region3: #{tpu_custom_call.1} parent=1 // pred_check_branch
      %18 = sbr.rel (0) target = $region5
    $region4: #{tpu_custom_call.1} parent=1 // pred_region
      _
    $region5: #{tpu_custom_call.1} parent=1 // pred_fallthru
      _
    // Predicated region
    $region6: #{tpu_custom_call.1} parent=1 // pred_check
      _
    $region7: #{tpu_custom_call.1} parent=1 // pred_check_branch
      %20 = sbr.rel (0) target = $region9
    $region8: #{tpu_custom_call.1} parent=1 // pred_region
      %22 = vsyncadd [#allocation3], 0
      %s23 = sshll.u32 %s1, 4
      %s24 = int_to_ptr.hbm [resolvable:$true] %s23
      %s25 = sshll.u32 [#allocation2], 4
      %s26 = int_to_ptr.vmem [resolvable:$true] %s25
      %31 = dma.hbm_to_vmem [thread:$0]  %s24, 256, %s26, [#allocation3], 128, 128, 8
    $region9: #{tpu_custom_call.1} parent=1 // pred_fallthru
      _
    // Predicated region
    $region10: #{tpu_custom_call.1} parent=1 // pred_check
      _
    $region11: #{tpu_custom_call.1} parent=1 // pred_check_branch
      %33 = sbr.rel (0) target = $region13
    $region12: #{tpu_custom_call.1} parent=1 // pred_region
      _
    $region13: #{tpu_custom_call.1} parent=1 // pred_fallthru
      _
    // Predicated region
    $region14: #{tpu_custom_call.1} parent=1 // pred_check
      _
    $region15: #{tpu_custom_call.1} parent=1 // pred_check_branch
      %35 = sbr.rel (0) target = $region17
    $region16: #{tpu_custom_call.1} parent=1 // pred_region
      _
    $region17: #{tpu_custom_call.1} parent=1 // pred_fallthru
      _
    // Predicated region
    $region18: #{tpu_custom_call.1} parent=1 // pred_check
      _
    $region19: #{tpu_custom_call.1} parent=1 // pred_check_branch
      %37 = sbr.rel (0) target = $region21
    $region20: #{tpu_custom_call.1} parent=1 // pred_region
      _
    $region21: #{tpu_custom_call.1} parent=1 // pred_fallthru
      _
    // Predicated region
    $region22: #{tpu_custom_call.1} parent=1 // pred_check
      _
    $region23: #{tpu_custom_call.1} parent=1 // pred_check_branch
      %39 = sbr.rel (0) target = $region25
    $region24: #{tpu_custom_call.1} parent=1 // pred_region
      _
    $region25: #{tpu_custom_call.1} parent=1 // pred_fallthru
      _
    // Predicated region
    $region26: #{tpu_custom_call.1} parent=1 // pred_check
      _
    $region27: #{tpu_custom_call.1} parent=1 // pred_check_branch
      %41 = sbr.rel (0) target = $region29
    $region28: #{tpu_custom_call.1} parent=1 // pred_region
      _
    $region29: #{tpu_custom_call.1} parent=1 // pred_fallthru
      _
    // Predicated region
    $region30: #{tpu_custom_call.1} parent=1 // pred_check
      _
    $region31: #{tpu_custom_call.1} parent=1 // pred_check_branch
      %43 = sbr.rel (0) target = $region33
    $region32: #{tpu_custom_call.1} parent=1 // pred_region
      _
    $region33: #{tpu_custom_call.1} parent=1 // pred_fallthru
      _
    // Predicated region
    $region34: #{tpu_custom_call.1} parent=1 // pred_check
      _
    $region35: #{tpu_custom_call.1} parent=1 // pred_check_branch
      %45 = sbr.rel (0) target = $region37
    $region36: #{tpu_custom_call.1} parent=1 // pred_region
      _
    $region37: #{tpu_custom_call.1} parent=1 // pred_fallthru
      _
    // Predicated region
    $region38: #{tpu_custom_call.1} parent=1 // pred_check
      _
    $region39: #{tpu_custom_call.1} parent=1 // pred_check_branch
      %47 = sbr.rel (0) target = $region41
    $region40: #{tpu_custom_call.1} parent=1 // pred_region
      _
    $region41: #{tpu_custom_call.1} parent=1 // pred_fallthru
      _
    // Predicated region
    $region42: #{tpu_custom_call.1} parent=1 // pred_check
      _
    $region43: #{tpu_custom_call.1} parent=1 // pred_check_branch
      %49 = sbr.rel (0) target = $region45
    $region44: #{tpu_custom_call.1} parent=1 // pred_region
      %51 = dma.done [#allocation3], 256
    $region45: #{tpu_custom_call.1} parent=1 // pred_fallthru
      _
    %v52 = vld [vmem:[%s2] sm:$0xf]
    %v53 = vld [vmem:[%s3] sm:$0xf]
    %v54 = vld [vmem:[%s0] sm:$0xff]
    %56 = vst [vmem:[#allocation1] ss:$2 sm:$0xff] %v54
    %v57 = vld.sshfl [vmem:[#allocation1] sm:$0xff pattern:$0x75316420]
    %v58 = vld.sshfl [vmem:[#allocation1 + $0x8] sm:$0xff pattern:$0x75316420]
    %vm59 = vcmask 31744
    %v61 = vsel %vm59, %v52, 0
    %vm63 = vcmask 1043456
    %v64 = vsel %vm63, %v57, 0
    %v66 = vsel %vm63, %v58, 0
    %68 = vmatpush.msra.mxu0 0.0
    %69 = vmatpush.msra.mxu0 0.0
    %70 = vmatpush.msra.mxu0 0.0
    %71 = vmatpush.msra.mxu0 0.0
    %72 = vmatpush.msra.mxu0 0.0
    %73 = vmatpush.msra.mxu0 0.0
    %74 = vmatpush.msra.mxu0 0.0
    %75 = vmatpush.msra.mxu0 0.0
    %76 = vmatpush.msra.mxu0 0.0
    %77 = vmatpush.msra.mxu0 0.0
    %78 = vmatpush.msra.mxu0 0.0
    %79 = vmatpush.msra.mxu0 0.0
    %80 = vmatpush.msra.mxu0 0.0
    %81 = vmatpush.msra.mxu0 0.0
    %82 = vmatpush.msra.mxu0 0.0
    %83 = vmatpush.msra.mxu0 %v64
    %84 = vmatmul.f32.gmra.mxu0 %v61
    %v85 = vpop.f32.mrf.mxu0
    %v86 = vadd.f32 0.0, %v85
    %87 = vdwg.mxu0
    %88 = vmatpush.msra.mxu0 0.0
    %89 = vmatpush.msra.mxu0 0.0
    %90 = vmatpush.msra.mxu0 0.0
    %91 = vmatpush.msra.mxu0 0.0
    %92 = vmatpush.msra.mxu0 0.0
    %93 = vmatpush.msra.mxu0 0.0
    %94 = vmatpush.msra.mxu0 0.0
    %95 = vmatpush.msra.mxu0 0.0
    %96 = vmatpush.msra.mxu0 0.0
    %97 = vmatpush.msra.mxu0 0.0
    %98 = vmatpush.msra.mxu0 0.0
    %99 = vmatpush.msra.mxu0 0.0
    %100 = vmatpush.msra.mxu0 0.0
    %101 = vmatpush.msra.mxu0 0.0
    %102 = vmatpush.msra.mxu0 0.0
    %103 = vmatpush.msra.mxu0 %v66
    %104 = vmatmul.f32.gmra.mxu0 %v61
    %v105 = vpop.f32.mrf.mxu0
    %v106 = vadd.f32 0.0, %v105
    %107 = vdwg.mxu0
    %v108 = vld [vmem:[#allocation2] sm:$0xff]
    %110 = vst [vmem:[#allocation1] ss:$2 sm:$0xff] %v108
    %v111 = vld.sshfl [vmem:[#allocation1] sm:$0xff pattern:$0x75316420]
    %v112 = vld.sshfl [vmem:[#allocation1 + $0x8] sm:$0xff pattern:$0x75316420]
    %v114 = vsel %vm59, %v53, 0
    %v116 = vsel %vm63, %v111, 0
    %v118 = vsel %vm63, %v112, 0
    %120 = vmatpush.msra.mxu0 0.0
    %121 = vmatpush.msra.mxu0 0.0
    %122 = vmatpush.msra.mxu0 0.0
    %123 = vmatpush.msra.mxu0 0.0
    %124 = vmatpush.msra.mxu0 0.0
    %125 = vmatpush.msra.mxu0 0.0
    %126 = vmatpush.msra.mxu0 0.0
    %127 = vmatpush.msra.mxu0 0.0
    %128 = vmatpush.msra.mxu0 0.0
    %129 = vmatpush.msra.mxu0 0.0
    %130 = vmatpush.msra.mxu0 0.0
    %131 = vmatpush.msra.mxu0 0.0
    %132 = vmatpush.msra.mxu0 0.0
    %133 = vmatpush.msra.mxu0 0.0
    %134 = vmatpush.msra.mxu0 0.0
    %135 = vmatpush.msra.mxu0 %v116
    %136 = vmatmul.f32.gmra.mxu0 %v114
    %v137 = vpop.f32.mrf.mxu0
    %v138 = vadd.f32 0.0, %v137
    %139 = vdwg.mxu0
    %140 = vmatpush.msra.mxu0 0.0
    %141 = vmatpush.msra.mxu0 0.0
    %142 = vmatpush.msra.mxu0 0.0
    %143 = vmatpush.msra.mxu0 0.0
    %144 = vmatpush.msra.mxu0 0.0
    %145 = vmatpush.msra.mxu0 0.0
    %146 = vmatpush.msra.mxu0 0.0
    %147 = vmatpush.msra.mxu0 0.0
    %148 = vmatpush.msra.mxu0 0.0
    %149 = vmatpush.msra.mxu0 0.0
    %150 = vmatpush.msra.mxu0 0.0
    %151 = vmatpush.msra.mxu0 0.0
    %152 = vmatpush.msra.mxu0 0.0
    %153 = vmatpush.msra.mxu0 0.0
    %154 = vmatpush.msra.mxu0 0.0
    %155 = vmatpush.msra.mxu0 %v118
    %156 = vmatmul.f32.gmra.mxu0 %v114
    %v157 = vpop.f32.mrf.mxu0
    %v158 = vadd.f32 0.0, %v157
    %159 = vdwg.mxu0
    %v160 = vsel %vm63, %v86, 0.0
    %v161 = vsel %vm63, %v106, 0.0
    %v162 = vadd.f32 %v160, %v161
    %163 = vadd.xlane.f32.xlu0 %v162
    %v164 = vpop.xlane.xlu0 %163
    %v165 = vadd.f32 %v164, 0.0
    %v166 = vmul.f32 %v86, %v86
    %v167 = vmul.f32 %v106, %v106
    %v168 = vsel %vm63, %v166, 0.0
    %v169 = vsel %vm63, %v167, 0.0
    %v170 = vadd.f32 %v168, %v169
    %171 = vadd.xlane.f32.xlu0 %v170
    %v172 = vpop.xlane.xlu0 %171
    %v173 = vadd.f32 %v172, 0.0
    %v174 = vsel %vm63, %v138, 0.0
    %v175 = vsel %vm63, %v158, 0.0
    %v176 = vadd.f32 %v174, %v175
    %177 = vadd.xlane.f32.xlu0 %v176
    %v178 = vpop.xlane.xlu0 %177
    %v179 = vadd.f32 %v178, 0.0
    %v180 = vmul.f32 %v138, %v138
    %v181 = vmul.f32 %v158, %v158
    %v182 = vsel %vm63, %v180, 0.0
    %v183 = vsel %vm63, %v181, 0.0
    %v184 = vadd.f32 %v182, %v183
    %185 = vadd.xlane.f32.xlu0 %v184
    %v186 = vpop.xlane.xlu0 %185
    %v187 = vadd.f32 %v186, 0.0
    %s188 = scalar_lea.vmem %s0, 8
    %v189 = vld [vmem:[%s188] sm:$0xff]
    %191 = vst [vmem:[#allocation1] ss:$2 sm:$0xff] %v189
    %v192 = vld.sshfl [vmem:[#allocation1] sm:$0xff pattern:$0x75316420]
    %v193 = vld.sshfl [vmem:[#allocation1 + $0x8] sm:$0xff pattern:$0x75316420]
    %v194 = vsel %vm63, %v192, 0
    %v196 = vsel %vm63, %v193, 0
    %198 = vmatpush.msra.mxu0 0.0
    %199 = vmatpush.msra.mxu0 0.0
    %200 = vmatpush.msra.mxu0 0.0
    %201 = vmatpush.msra.mxu0 0.0
    %202 = vmatpush.msra.mxu0 0.0
    %203 = vmatpush.msra.mxu0 0.0
    %204 = vmatpush.msra.mxu0 0.0
    %205 = vmatpush.msra.mxu0 0.0
    %206 = vmatpush.msra.mxu0 0.0
    %207 = vmatpush.msra.mxu0 0.0
    %208 = vmatpush.msra.mxu0 0.0
    %209 = vmatpush.msra.mxu0 0.0
    %210 = vmatpush.msra.mxu0 0.0
    %211 = vmatpush.msra.mxu0 0.0
    %212 = vmatpush.msra.mxu0 0.0
    %213 = vmatpush.msra.mxu0 %v194
    %214 = vmatmul.f32.gmra.mxu0 %v61
    %v215 = vpop.f32.mrf.mxu0
    %v216 = vadd.f32 0.0, %v215
    %217 = vdwg.mxu0
    %218 = vmatpush.msra.mxu0 0.0
    %219 = vmatpush.msra.mxu0 0.0
    %220 = vmatpush.msra.mxu0 0.0
    %221 = vmatpush.msra.mxu0 0.0
    %222 = vmatpush.msra.mxu0 0.0
    %223 = vmatpush.msra.mxu0 0.0
    %224 = vmatpush.msra.mxu0 0.0
    %225 = vmatpush.msra.mxu0 0.0
    %226 = vmatpush.msra.mxu0 0.0
    %227 = vmatpush.msra.mxu0 0.0
    %228 = vmatpush.msra.mxu0 0.0
    %229 = vmatpush.msra.mxu0 0.0
    %230 = vmatpush.msra.mxu0 0.0
    %231 = vmatpush.msra.mxu0 0.0
    %232 = vmatpush.msra.mxu0 0.0
    %233 = vmatpush.msra.mxu0 %v196
    %234 = vmatmul.f32.gmra.mxu0 %v61
    %v235 = vpop.f32.mrf.mxu0
    %v236 = vadd.f32 0.0, %v235
    %237 = vdwg.mxu0
    %s238 = scalar_lea.vmem [#allocation2], 8
    %v239 = vld [vmem:[%s238] sm:$0xff]
    %241 = vst [vmem:[#allocation1] ss:$2 sm:$0xff] %v239
    %v242 = vld.sshfl [vmem:[#allocation1] sm:$0xff pattern:$0x75316420]
    %v243 = vld.sshfl [vmem:[#allocation1 + $0x8] sm:$0xff pattern:$0x75316420]
    %v244 = vsel %vm63, %v242, 0
    %v246 = vsel %vm63, %v243, 0
    %248 = vmatpush.msra.mxu0 0.0
    %249 = vmatpush.msra.mxu0 0.0
    %250 = vmatpush.msra.mxu0 0.0
    %251 = vmatpush.msra.mxu0 0.0
    %252 = vmatpush.msra.mxu0 0.0
    %253 = vmatpush.msra.mxu0 0.0
    %254 = vmatpush.msra.mxu0 0.0
    %255 = vmatpush.msra.mxu0 0.0
    %256 = vmatpush.msra.mxu0 0.0
    %257 = vmatpush.msra.mxu0 0.0
    %258 = vmatpush.msra.mxu0 0.0
    %259 = vmatpush.msra.mxu0 0.0
    %260 = vmatpush.msra.mxu0 0.0
    %261 = vmatpush.msra.mxu0 0.0
    %262 = vmatpush.msra.mxu0 0.0
    %263 = vmatpush.msra.mxu0 %v244
    %264 = vmatmul.f32.gmra.mxu0 %v114
    %v265 = vpop.f32.mrf.mxu0
    %v266 = vadd.f32 0.0, %v265
    %267 = vdwg.mxu0
    %268 = vmatpush.msra.mxu0 0.0
    %269 = vmatpush.msra.mxu0 0.0
    %270 = vmatpush.msra.mxu0 0.0
    %271 = vmatpush.msra.mxu0 0.0
    %272 = vmatpush.msra.mxu0 0.0
    %273 = vmatpush.msra.mxu0 0.0
    %274 = vmatpush.msra.mxu0 0.0
    %275 = vmatpush.msra.mxu0 0.0
    %276 = vmatpush.msra.mxu0 0.0
    %277 = vmatpush.msra.mxu0 0.0
    %278 = vmatpush.msra.mxu0 0.0
    %279 = vmatpush.msra.mxu0 0.0
    %280 = vmatpush.msra.mxu0 0.0
    %281 = vmatpush.msra.mxu0 0.0
    %282 = vmatpush.msra.mxu0 0.0
    %283 = vmatpush.msra.mxu0 %v246
    %284 = vmatmul.f32.gmra.mxu0 %v114
    %v285 = vpop.f32.mrf.mxu0
    %v286 = vadd.f32 0.0, %v285
    %287 = vdwg.mxu0
    %v288 = vsel %vm63, %v216, 0.0
    %v289 = vsel %vm63, %v236, 0.0
    %v290 = vadd.f32 %v288, %v289
    %291 = vadd.xlane.f32.xlu0 %v290
    %v292 = vpop.xlane.xlu0 %291
    %v293 = vadd.f32 %v165, %v292
    %v294 = vmul.f32 %v216, %v216
    %v295 = vmul.f32 %v236, %v236
    %v296 = vsel %vm63, %v294, 0.0
    %v297 = vsel %vm63, %v295, 0.0
    %v298 = vadd.f32 %v296, %v297
    %299 = vadd.xlane.f32.xlu0 %v298
    %v300 = vpop.xlane.xlu0 %299
    %v301 = vadd.f32 %v173, %v300
    %v302 = vsel %vm63, %v266, 0.0
    %v303 = vsel %vm63, %v286, 0.0
    %v304 = vadd.f32 %v302, %v303
    %305 = vadd.xlane.f32.xlu0 %v304
    %v306 = vpop.xlane.xlu0 %305
    %v307 = vadd.f32 %v179, %v306
    %v308 = vmul.f32 %v266, %v266
    %v309 = vmul.f32 %v286, %v286
    %v310 = vsel %vm63, %v308, 0.0
    %v311 = vsel %vm63, %v309, 0.0
    %v312 = vadd.f32 %v310, %v311
    %313 = vadd.xlane.f32.xlu0 %v312
    %v314 = vpop.xlane.xlu0 %313
    %v315 = vadd.f32 %v187, %v314
    %v316 = vld [vmem:[%s4] sm:$0xf]
    %v317 = vld [vmem:[%s5] sm:$0xf]
    %v318 = vmul.f32 %v293, 0.001953125
    %v319 = vmul.f32 %v301, 0.001953125
    %v320 = vmul.f32 %v318, %v318
    %v321 = vsub.f32 %v319, %v320
    %v322 = vadd.f32 %v321, 1e-05
    %v323 = vrsqrt.pop %v322
    %v324 = vmul.f32 %v323, %v322
    %v325 = vmul.f32 %v324, %v323
    %v326 = vmul.f32 0.5, %v325
    %v327 = vsub.f32 1.5, %v326
    %v328 = vmul.f32 %v323, %v327
    %vm329 = vweird.f32 %v322
    %vm330 = vweird.f32 %v323
    %vm331 = vmor %vm329, %vm330
    %v332 = vsel %vm331, %v323, %v328
    %v333 = vmul.f32 %v316, %v332
    %v334 = vmul.f32 %v318, %v333
    %v335 = vsub.f32 %v317, %v334
    %v336 = vld [vmem:[%s6] sm:$0xf]
    %v337 = vld [vmem:[%s7] sm:$0xf]
    %v338 = vmul.f32 %v307, 0.001953125
    %v339 = vmul.f32 %v315, 0.001953125
    %v340 = vmul.f32 %v338, %v338
    %v341 = vsub.f32 %v339, %v340
    %v342 = vadd.f32 %v341, 1e-05
    %v343 = vrsqrt.pop %v342
    %v344 = vmul.f32 %v343, %v342
    %v345 = vmul.f32 %v344, %v343
    %v346 = vmul.f32 0.5, %v345
    %v347 = vsub.f32 1.5, %v346
    %v348 = vmul.f32 %v343, %v347
    %vm349 = vweird.f32 %v342
    %vm350 = vweird.f32 %v343
    %vm351 = vmor %vm349, %vm350
    %v352 = vsel %vm351, %v343, %v348
    %v353 = vmul.f32 %v336, %v352
    %v354 = vmul.f32 %v338, %v353
    %v355 = vsub.f32 %v337, %v354
    %357 = vset.pattern.permute.xlu0 0
    %358 = vperm.xlu0 %357, %v333
    %v359 = vpop.permute.xlu0 %358
    %v361 = vmul.f32 %v86, %v359
    %v362 = vmul.f32 %v106, %v359
    %364 = vset.pattern.permute.xlu0 0
    %365 = vperm.xlu0 %364, %v335
    %v366 = vpop.permute.xlu0 %365
    %v368 = vadd.f32 %v361, %v366
    %v369 = vadd.f32 %v362, %v366
    %v370 = vmax.f32 %v368, 0.0
    %v371 = vmax.f32 %v369, 0.0
    %373 = vset.pattern.permute.xlu0 0
    %374 = vperm.xlu0 %373, %v353
    %v375 = vpop.permute.xlu0 %374
    %v377 = vmul.f32 %v138, %v375
    %v378 = vmul.f32 %v158, %v375
    %380 = vset.pattern.permute.xlu0 0
    %381 = vperm.xlu0 %380, %v355
    %v382 = vpop.permute.xlu0 %381
    %v384 = vadd.f32 %v377, %v382
    %v385 = vadd.f32 %v378, %v382
    %v386 = vmax.f32 %v384, 0.0
    %v387 = vmax.f32 %v385, 0.0
    %v388 = vadd.f32 %v370, %v386
    %v389 = vadd.f32 %v371, %v387
    %v390 = vmul.f32 %v388, 0.5
    %v391 = vmul.f32 %v389, 0.5
    %v392 = vtanh.pop %v390
    %v393 = vtanh.pop %v391
    %v394 = vadd.f32 %v392, 1.0
    %v395 = vadd.f32 %v393, 1.0
    %v396 = vmul.f32 %v394, 0.5
    %v397 = vmul.f32 %v395, 0.5
    %v398 = vsub.f32 %v54, %v108
    %400 = vst [vmem:[#allocation1] ss:$2 sm:$0xff] %v398
    %v401 = vld.sshfl [vmem:[#allocation1] sm:$0xff pattern:$0x75316420]
    %v402 = vld.sshfl [vmem:[#allocation1 + $0x8] sm:$0xff pattern:$0x75316420]
    %v405 = vmul.f32 %v396, %v401
    %v406 = vmul.f32 %v397, %v402
    %v409 = vrot.slane %v406, 4
    %v410 = vsel %vm63, %v405, %v409
    %v412 = vadd.f32 %v108, %v410
    %414 = vst [vmem:[#allocation1] ss:$2 sm:$0xff] %v412
    %v415 = vld.sshfl [vmem:[#allocation1] sm:$0xff pattern:$0x75316420]
    %v416 = vld.sshfl [vmem:[#allocation1 + $0x8] sm:$0xff pattern:$0x75316420]
    %v419 = vsel %vm63, %v415, 0.0
    %v420 = vsel %vm63, %v416, 0.0
    %v421 = vadd.f32 %v419, %v420
    %422 = vadd.xlane.f32.xlu0 %v421
    %v423 = vpop.xlane.xlu0 %422
    %v424 = vadd.f32 %v423, 0.0
    %v425 = vmul.f32 %v412, %v412
    %427 = vst [vmem:[#allocation1] ss:$2 sm:$0xff] %v425
    %v428 = vld.sshfl [vmem:[#allocation1] sm:$0xff pattern:$0x75316420]
    %v429 = vld.sshfl [vmem:[#allocation1 + $0x8] sm:$0xff pattern:$0x75316420]
    %v432 = vsel %vm63, %v428, 0.0
    %v433 = vsel %vm63, %v429, 0.0
    %v434 = vadd.f32 %v432, %v433
    %435 = vadd.xlane.f32.xlu0 %v434
    %v436 = vpop.xlane.xlu0 %435
    %v437 = vadd.f32 %v436, 0.0
    %438 = vst [vmem:[#allocation5] sm:$0xff] %v412
    %v439 = vld [vmem:[%s188] sm:$0xff]
    %v440 = vld [vmem:[%s238] sm:$0xff]
    %442 = vst [vmem:[#allocation1] ss:$2 sm:$0xff] %v439
    %v443 = vld.sshfl [vmem:[#allocation1] sm:$0xff pattern:$0x75316420]
    %v444 = vld.sshfl [vmem:[#allocation1 + $0x8] sm:$0xff pattern:$0x75316420]
    %v445 = vsel %vm63, %v443, 0
    %v447 = vsel %vm63, %v444, 0
    %449 = vmatpush.msra.mxu0 0.0
    %450 = vmatpush.msra.mxu0 0.0
    %451 = vmatpush.msra.mxu0 0.0
    %452 = vmatpush.msra.mxu0 0.0
    %453 = vmatpush.msra.mxu0 0.0
    %454 = vmatpush.msra.mxu0 0.0
    %455 = vmatpush.msra.mxu0 0.0
    %456 = vmatpush.msra.mxu0 0.0
    %457 = vmatpush.msra.mxu0 0.0
    %458 = vmatpush.msra.mxu0 0.0
    %459 = vmatpush.msra.mxu0 0.0
    %460 = vmatpush.msra.mxu0 0.0
    %461 = vmatpush.msra.mxu0 0.0
    %462 = vmatpush.msra.mxu0 0.0
    %463 = vmatpush.msra.mxu0 0.0
    %464 = vmatpush.msra.mxu0 %v445
    %465 = vmatmul.f32.gmra.mxu0 %v61
    %v466 = vpop.f32.mrf.mxu0
    %v467 = vadd.f32 0.0, %v466
    %468 = vdwg.mxu0
    %469 = vmatpush.msra.mxu0 0.0
    %470 = vmatpush.msra.mxu0 0.0
    %471 = vmatpush.msra.mxu0 0.0
    %472 = vmatpush.msra.mxu0 0.0
    %473 = vmatpush.msra.mxu0 0.0
    %474 = vmatpush.msra.mxu0 0.0
    %475 = vmatpush.msra.mxu0 0.0
    %476 = vmatpush.msra.mxu0 0.0
    %477 = vmatpush.msra.mxu0 0.0
    %478 = vmatpush.msra.mxu0 0.0
    %479 = vmatpush.msra.mxu0 0.0
    %480 = vmatpush.msra.mxu0 0.0
    %481 = vmatpush.msra.mxu0 0.0
    %482 = vmatpush.msra.mxu0 0.0
    %483 = vmatpush.msra.mxu0 0.0
    %484 = vmatpush.msra.mxu0 %v447
    %485 = vmatmul.f32.gmra.mxu0 %v61
    %v486 = vpop.f32.mrf.mxu0
    %v487 = vadd.f32 0.0, %v486
    %488 = vdwg.mxu0
    %490 = vst [vmem:[#allocation1] ss:$2 sm:$0xff] %v440
    %v491 = vld.sshfl [vmem:[#allocation1] sm:$0xff pattern:$0x75316420]
    %v492 = vld.sshfl [vmem:[#allocation1 + $0x8] sm:$0xff pattern:$0x75316420]
    %v493 = vsel %vm63, %v491, 0
    %v495 = vsel %vm63, %v492, 0
    %497 = vmatpush.msra.mxu0 0.0
    %498 = vmatpush.msra.mxu0 0.0
    %499 = vmatpush.msra.mxu0 0.0
    %500 = vmatpush.msra.mxu0 0.0
    %501 = vmatpush.msra.mxu0 0.0
    %502 = vmatpush.msra.mxu0 0.0
    %503 = vmatpush.msra.mxu0 0.0
    %504 = vmatpush.msra.mxu0 0.0
    %505 = vmatpush.msra.mxu0 0.0
    %506 = vmatpush.msra.mxu0 0.0
    %507 = vmatpush.msra.mxu0 0.0
    %508 = vmatpush.msra.mxu0 0.0
    %509 = vmatpush.msra.mxu0 0.0
    %510 = vmatpush.msra.mxu0 0.0
    %511 = vmatpush.msra.mxu0 0.0
    %512 = vmatpush.msra.mxu0 %v493
    %513 = vmatmul.f32.gmra.mxu0 %v114
    %v514 = vpop.f32.mrf.mxu0
    %v515 = vadd.f32 0.0, %v514
    %516 = vdwg.mxu0
    %517 = vmatpush.msra.mxu0 0.0
    %518 = vmatpush.msra.mxu0 0.0
    %519 = vmatpush.msra.mxu0 0.0
    %520 = vmatpush.msra.mxu0 0.0
    %521 = vmatpush.msra.mxu0 0.0
    %522 = vmatpush.msra.mxu0 0.0
    %523 = vmatpush.msra.mxu0 0.0
    %524 = vmatpush.msra.mxu0 0.0
    %525 = vmatpush.msra.mxu0 0.0
    %526 = vmatpush.msra.mxu0 0.0
    %527 = vmatpush.msra.mxu0 0.0
    %528 = vmatpush.msra.mxu0 0.0
    %529 = vmatpush.msra.mxu0 0.0
    %530 = vmatpush.msra.mxu0 0.0
    %531 = vmatpush.msra.mxu0 0.0
    %532 = vmatpush.msra.mxu0 %v495
    %533 = vmatmul.f32.gmra.mxu0 %v114
    %v534 = vpop.f32.mrf.mxu0
    %v535 = vadd.f32 0.0, %v534
    %536 = vdwg.mxu0
    %v537 = vmul.f32 %v467, %v359
    %v538 = vmul.f32 %v487, %v359
    %v539 = vadd.f32 %v537, %v366
    %v540 = vadd.f32 %v538, %v366
    %v541 = vmax.f32 %v539, 0.0
    %v542 = vmax.f32 %v540, 0.0
    %v543 = vmul.f32 %v515, %v375
    %v544 = vmul.f32 %v535, %v375
    %v545 = vadd.f32 %v543, %v382
    %v546 = vadd.f32 %v544, %v382
    %v547 = vmax.f32 %v545, 0.0
    %v548 = vmax.f32 %v546, 0.0
    %v549 = vadd.f32 %v541, %v547
    %v550 = vadd.f32 %v542, %v548
    %v551 = vmul.f32 %v549, 0.5
    %v552 = vmul.f32 %v550, 0.5
    %v553 = vtanh.pop %v551
    %v554 = vtanh.pop %v552
    %v555 = vadd.f32 %v553, 1.0
    %v556 = vadd.f32 %v554, 1.0
    %v557 = vmul.f32 %v555, 0.5
    %v558 = vmul.f32 %v556, 0.5
    %v559 = vsub.f32 %v439, %v440
    %561 = vst [vmem:[#allocation1] ss:$2 sm:$0xff] %v559
    %v562 = vld.sshfl [vmem:[#allocation1] sm:$0xff pattern:$0x75316420]
    %v563 = vld.sshfl [vmem:[#allocation1 + $0x8] sm:$0xff pattern:$0x75316420]
    %v566 = vmul.f32 %v557, %v562
    %v567 = vmul.f32 %v558, %v563
    %v570 = vrot.slane %v567, 4
    %v571 = vsel %vm63, %v566, %v570
    %v573 = vadd.f32 %v440, %v571
    %575 = vst [vmem:[#allocation1] ss:$2 sm:$0xff] %v573
    %v576 = vld.sshfl [vmem:[#allocation1] sm:$0xff pattern:$0x75316420]
    %v577 = vld.sshfl [vmem:[#allocation1 + $0x8] sm:$0xff pattern:$0x75316420]
    %v580 = vsel %vm63, %v576, 0.0
    %v581 = vsel %vm63, %v577, 0.0
    %v582 = vadd.f32 %v580, %v581
    %583 = vadd.xlane.f32.xlu0 %v582
    %v584 = vpop.xlane.xlu0 %583
    %v585 = vadd.f32 %v424, %v584
    %v586 = vmul.f32 %v573, %v573
    %588 = vst [vmem:[#allocation1] ss:$2 sm:$0xff] %v586
    %v589 = vld.sshfl [vmem:[#allocation1] sm:$0xff pattern:$0x75316420]
    %v590 = vld.sshfl [vmem:[#allocation1 + $0x8] sm:$0xff pattern:$0x75316420]
    %v593 = vsel %vm63, %v589, 0.0
    %v594 = vsel %vm63, %v590, 0.0
    %v595 = vadd.f32 %v593, %v594
    %596 = vadd.xlane.f32.xlu0 %v595
    %v597 = vpop.xlane.xlu0 %596
    %v598 = vadd.f32 %v437, %v597
    %s599 = scalar_lea.vmem [#allocation5], 8
    %600 = vst [vmem:[%s599] sm:$0xff] %v573
    %v601 = vld [vmem:[%s8] sm:$0xf]
    %v602 = vld [vmem:[%s9] sm:$0xf]
    %v603 = vmul.f32 %v585, 0.001953125
    %v604 = vmul.f32 %v598, 0.001953125
    %v605 = vmul.f32 %v603, %v603
    %v606 = vsub.f32 %v604, %v605
    %v607 = vadd.f32 %v606, 1e-05
    %v608 = vrsqrt.pop %v607
    %v609 = vmul.f32 %v608, %v607
    %v610 = vmul.f32 %v609, %v608
    %v611 = vmul.f32 0.5, %v610
    %v612 = vsub.f32 1.5, %v611
    %v613 = vmul.f32 %v608, %v612
    %vm614 = vweird.f32 %v607
    %vm615 = vweird.f32 %v608
    %vm616 = vmor %vm614, %vm615
    %v617 = vsel %vm616, %v608, %v613
    %v618 = vmul.f32 %v601, %v617
    %v619 = vmul.f32 %v603, %v618
    %v620 = vsub.f32 %v602, %v619
    %v621 = vld [vmem:[#allocation5] sm:$0xff]
    %623 = vset.pattern.permute.xlu0 0
    %624 = vperm.xlu0 %623, %v618
    %v625 = vpop.permute.xlu0 %624
    %v627 = vunpack.c.l.s4 839922192
    %v628 = vunpack.c.0.s8 %v627
    %v629 = vperm.slane %v625, %v628
    %v631 = vmul.f32 %v621, %v629
    %633 = vset.pattern.permute.xlu0 0
    %634 = vperm.xlu0 %633, %v620
    %v635 = vpop.permute.xlu0 %634
    %v637 = vunpack.c.l.s4 839922192
    %v638 = vunpack.c.0.s8 %v637
    %v639 = vperm.slane %v635, %v638
    %v641 = vadd.f32 %v631, %v639
    %642 = vst [vmem:[#allocation5] sm:$0xff] %v641
    %v643 = vld [vmem:[%s599] sm:$0xff]
    %v644 = vmul.f32 %v643, %v629
    %v645 = vadd.f32 %v644, %v639
    %646 = vst [vmem:[%s599] sm:$0xff] %v645
    // Predicated region
    $region46: #{tpu_custom_call.1} parent=1 // pred_check
      _
    $region47: #{tpu_custom_call.1} parent=1 // pred_check_branch
      %648 = sbr.rel (0) target = $region49
    $region48: #{tpu_custom_call.1} parent=1 // pred_region
      %650 = vsyncadd [#allocation4], 0
      %s651 = sshll.u32 [#allocation5], 4
      %s652 = int_to_ptr.vmem [resolvable:$true] %s651
      %s653 = sshll.u32 %s10, 4
      %s654 = int_to_ptr.hbm [resolvable:$true] %s653
      %659 = dma.vmem_to_hbm [thread:$0]  %s652, 256, %s654, [#allocation4], 128, 128, 8
    $region49: #{tpu_custom_call.1} parent=1 // pred_fallthru
      _
    // Predicated region
    $region50: #{tpu_custom_call.1} parent=1 // pred_check
      _
    $region51: #{tpu_custom_call.1} parent=1 // pred_check_branch
      %661 = sbr.rel (0) target = $region53
    $region52: #{tpu_custom_call.1} parent=1 // pred_region
      %663 = dma.done [#allocation4], 256
    $region53: #{tpu_custom_call.1} parent=1 // pred_fallthru
      _
    %664 = vsyncpa [#allocation3], 1
    %665 = vsyncpa [#allocation4], 1

</llo_original>
